<compile_context>
chip_gen: v7x
topology: tpu7x:2x2x1
jax: 0.10.0
libtpu: 0.0.40
codegen_flags: <defaults>
</compile_context>

<pallas_src>
import math

import jax
import jax.numpy as jnp
from jax.experimental import pallas as pl
from jax.experimental.pallas import tpu as pltpu


def _drop_path_kernel(x_ref, scale_ref, o_ref):
    # x_ref / o_ref : (BB, TC) tile of the flattened (B, M) view.
    # scale_ref     : (BB, 1) per-sample scale, f32 (cast, then lane-broadcast).
    o_ref[...] = x_ref[...] * scale_ref[...].astype(x_ref.dtype)


def _round_up(x, m):
    return (x + m - 1) // m * m


def _choose_block(B, M, itemsize, target_bytes=4 * 1024 * 1024, min_steps=8):
    """Pick a (BB, TC) block for the flattened (B, M) view.

    Constraints:
      * TC is a multiple of 128 (lane-dense) whenever M >= 128; if M < 128 we
        use the full trailing extent (legal as 'equal full array dim').
      * BB is a multiple of the dtype-native sublane quantum (8/16/32 for
        4/2/1-byte dtypes) or equals B when B is smaller than that quantum.
      * BB * TC * itemsize <= target_bytes, so in+out double-buffered blocks
        stay ~4x target (~16 MiB) -- inside every chip's VMEM.
      * The total grid has >= min_steps steps (shrink the block if needed) so
        the software pipeline can overlap DMA with the next/previous step.
    """
    # Native tile is (32 // itemsize * 8, 128): 8 rows f32, 16 bf16, 32 int8.
    sub_q = max(8, (8 * 4) // itemsize)

    # Lane (column) block.
    if M < 128:
        TC = M  # full trailing extent (tiny tensor; masked stores unavoidable)
    else:
        tc_cap = max(128, (target_bytes // (sub_q * itemsize)) // 128 * 128)
        TC = min(_round_up(M, 128), tc_cap)

    # Sublane (row) block.
    rows_fit = max(1, target_bytes // (TC * itemsize))
    if B <= sub_q:
        BB = B  # full batch extent -- always legal
    else:
        BB = min(_round_up(B, sub_q), max(sub_q, (rows_fit // sub_q) * sub_q))

    # Enforce a minimum number of grid steps so double-buffering has work to
    # overlap with (and both v7x TensorCores get a reasonable share).
    def steps(bb, tc):
        return pl.cdiv(B, bb) * pl.cdiv(M, tc)

    while steps(BB, TC) < min_steps:
        can_shrink_tc = TC > 128
        can_shrink_bb = BB > sub_q
        if can_shrink_tc and (not can_shrink_bb or (TC // 128) >= (BB // sub_q)):
            TC = max(128, ((TC // 2) // 128) * 128)
        elif can_shrink_bb:
            BB = max(sub_q, ((BB // 2) // sub_q) * sub_q)
        else:
            break
    return BB, TC


def drop_path(x, key, drop_prob: float = 0.0, training: bool = False):
    """Pallas implementation of timm-style drop_path (stochastic depth)."""
    if drop_prob == 0.0 or not training:
        return x
    if drop_prob >= 1.0:
        # keep_prob == 0: every path dropped (avoid 0/0 NaN in the scaling).
        return jnp.zeros_like(x)

    keep_prob = 1.0 - drop_prob
    B = x.shape[0]
    M = math.prod(x.shape[1:])

    # Per-sample binary mask, identical semantics to:
    #   random_tensor = keep_prob + torch.rand((B,1,...,1)); random_tensor.floor_()
    random_tensor = jnp.floor(
        keep_prob + jax.random.uniform(key, (B,), dtype=jnp.float32)
    )
    # Fold the 1/keep_prob division into the per-sample scalar.
    scale = (random_tensor / keep_prob).astype(jnp.float32).reshape(B, 1)

    # Flatten to a lane-dense 2-D view (free for contiguous default layouts).
    x2 = x.reshape(B, M)
    BB, TC = _choose_block(B, M, x.dtype.itemsize)

    grid = (pl.cdiv(B, BB), pl.cdiv(M, TC))
    out = pl.pallas_call(
        _drop_path_kernel,
        out_shape=jax.ShapeDtypeStruct((B, M), x.dtype),
        grid=grid,
        in_specs=[
            pl.BlockSpec((BB, TC), lambda i, j: (i, j)),
            pl.BlockSpec((BB, 1), lambda i, j: (i, 0)),
        ],
        out_specs=pl.BlockSpec((BB, TC), lambda i, j: (i, j)),
        compiler_params=pltpu.CompilerParams(
            dimension_semantics=("parallel", "parallel"),
            # ~16 MiB actually used; 48 MiB is under v7x's 64 MiB physical VMEM
            # and raises v5e's 16 MiB default scoped limit.
            vmem_limit_bytes=48 * 1024 * 1024,
        ),
    )(x2, scale)
    return out.reshape(x.shape)


class DropPath:
    """JAX/Pallas port of the PyTorch DropPath module (forward pass)."""

    def __init__(self, drop_prob=None):
        self.drop_prob = drop_prob
        self.training = True  # module default in the reference code path

    def __call__(self, x, key):
        p = 0.0 if self.drop_prob is None else float(self.drop_prob)
        return drop_path(x, key, drop_prob=p, training=self.training)


if __name__ == "__main__":
    key = jax.random.PRNGKey(0)
    k_x, k_mask, k_x2, k_x3 = jax.random.split(key, 4)

    keep_prob = 1.0 - 0.25
    module = DropPath(drop_prob=0.25)
    module.training = True

    # ---- f32 case (B, N, D) = (2, 8, 32) ----
    B, N, D = 2, 8, 32
    x = jax.random.normal(k_x, (B, N, D), dtype=jnp.float32)
    out = jax.block_until_ready(module(x, k_mask))

    random_tensor = jnp.floor(
        keep_prob + jax.random.uniform(k_mask, (B,), dtype=jnp.float32)
    )
    ref = x * (random_tensor / keep_prob).reshape(B, 1, 1)
    assert out.shape == x.shape and out.dtype == x.dtype
    assert jnp.allclose(out, ref, atol=1e-6, rtol=1e-5)

    # ---- bf16 case (lane-dense path, native-dtype multiply, sub_q=16) ----
    B2, N2, D2 = 4, 8, 128
    xb = jax.random.normal(k_x2, (B2, N2, D2), dtype=jnp.bfloat16)
    out_b = jax.block_until_ready(module(xb, k_mask))

    rt2 = jnp.floor(keep_prob + jax.random.uniform(k_mask, (B2,), dtype=jnp.float32))
    scale_b = (rt2 / keep_prob).astype(jnp.bfloat16).reshape(B2, 1, 1)
    ref_b = xb * scale_b
    assert out_b.shape == xb.shape and out_b.dtype == xb.dtype
    assert jnp.allclose(
        out_b.astype(jnp.float32), ref_b.astype(jnp.float32), atol=1e-2, rtol=1e-2
    )

    # ---- M % 128 != 0 case (ragged last column tile, masked edge stores) ----
    B3, N3, D3 = 2, 4, 48  # M = 192
    xc = jax.random.normal(k_x3, (B3, N3, D3), dtype=jnp.float32)
    out_c = jax.block_until_ready(module(xc, k_mask))
    rt3 = jnp.floor(keep_prob + jax.random.uniform(k_mask, (B3,), dtype=jnp.float32))
    ref_c = xc * (rt3 / keep_prob).reshape(B3, 1, 1)
    assert out_c.shape == xc.shape
    assert jnp.allclose(out_c, ref_c, atol=1e-6, rtol=1e-5)

    # ---- drop_prob = 1.0: all paths dropped, no NaN ----
    module_all = DropPath(drop_prob=1.0)
    out_all = jax.block_until_ready(module_all(x, k_mask))
    assert jnp.array_equal(out_all, jnp.zeros_like(x))

    # ---- Eval / drop_prob=0 path: identity ----
    module.training = False
    out_eval = jax.block_until_ready(module(x, k_mask))
    assert jnp.array_equal(out_eval, x)

    print("KERNEL_OK")
</pallas_src>

<mosaic_0001>
module attributes {stable_mosaic.version = 11 : i64} {
  func.func @_drop_path_kernel(%arg0: i32, %arg1: i32, %arg2: memref<2x128xf32, #tpu.memory_space<vmem>>, %arg3: memref<2x1xf32, #tpu.memory_space<vmem>>, %arg4: memref<2x128xf32, #tpu.memory_space<vmem>>) attributes {dimension_semantics = [#tpu.dimension_semantics<parallel>, #tpu.dimension_semantics<parallel>], iteration_bounds = array<i64: 1, 2>, scalar_prefetch = 0 : i64, scratch_operands = 0 : i64, tpu.core_type = #tpu.core_type<tc>, window_params = [{transform_indices = @transform_0, window_bounds = array<i64: 2, 128>}, {transform_indices = @transform_1, window_bounds = array<i64: 2, 1>}, {transform_indices = @transform_2, window_bounds = array<i64: 2, 128>}]} {
    %c0 = arith.constant 0 : index
    %c0_0 = arith.constant 0 : index
    %0 = vector.load %arg2[%c0, %c0_0] : memref<2x128xf32, #tpu.memory_space<vmem>>, vector<2x128xf32>
    %c0_1 = arith.constant 0 : index
    %c0_2 = arith.constant 0 : index
    %1 = vector.load %arg3[%c0_1, %c0_2] : memref<2x1xf32, #tpu.memory_space<vmem>>, vector<2x1xf32>
    %2 = vector.broadcast %1 : vector<2x1xf32> to vector<2x128xf32>
    %3 = arith.mulf %0, %2 : vector<2x128xf32>
    %c0_3 = arith.constant 0 : index
    %c0_4 = arith.constant 0 : index
    %4 = vector.load %arg4[%c0_3, %c0_4] : memref<2x128xf32, #tpu.memory_space<vmem>>, vector<2x128xf32>
    tpu.vector_store %arg4[%c0_3, %c0_4], %3 {strides = array<i32>} : memref<2x128xf32, #tpu.memory_space<vmem>>, vector<2x128xf32>,
    return
  }
  func.func @transform_0(%arg0: i32, %arg1: i32) -> (i32, i32) {
    %c0_i32 = arith.constant 0 : i32
    return %arg0, %arg1 : i32, i32
  }
  func.func @transform_1(%arg0: i32, %arg1: i32) -> (i32, i32) {
    %c0_i32 = arith.constant 0 : i32
    %c0_i32_0 = arith.constant 0 : i32
    return %arg0, %c0_i32 : i32, i32
  }
  func.func @transform_2(%arg0: i32, %arg1: i32) -> (i32, i32) {
    %c0_i32 = arith.constant 0 : i32
    return %arg0, %arg1 : i32, i32
  }
}

</mosaic_0001>

<llo_original>
// kernel: tpu_custom_call.1
$region0: #{tpu_custom_call.1}
  #allocation0 [shape = 'u32[]', space=smem, size = 0x4, offset = 0x4, fixed_abs, tag = 'smem constant byte address 0x4 - core index']
  #allocation1 [shape = 'u32[144,128]{1,0:T(1,128)}', space=vmem, size = 0x12000, scoped, tag = 'internal scratch']
  %s0 = inlined_call_operand.hbm [shape: f32[2,256], index: 0, kind: input, shape index: {}]
  %s1 = inlined_call_operand.vmem [shape: f32[2,1], index: 1, kind: input, shape index: {}]
  %s2 = inlined_call_operand.hbm [shape: f32[2,256], index: 2, kind: output, shape index: {}]
  %s3 = sld [smem:[#allocation0]]
  $region45: #{tpu_custom_call.1} parent=0
    _
  %s5 = ssub.s32 1, %s3
  %s6 = scalar_select 0, %s5, %s3
  $region1: #{tpu_custom_call.1} parent=0
    #allocation2 [shape = 'u8[2048]{0}', space=vmem, size = 0x800, scoped, tag = 'input window, operand 0']
    #allocation3 [shape = 's32[2]{0}', space=sflag, size = 0x8, scoped, tag = 'scoped memory for tpu_custom_call.1']
    #allocation4 [shape = 's32[2]{0}', space=sflag, size = 0x8, scoped, tag = 'scoped memory for tpu_custom_call.1']
    #allocation5 [shape = 'u8[2048]{0}', space=vmem, size = 0x800, scoped, tag = 'output window, operand 0']
    %7 = vsyncpa [#allocation3], 0
    %s8 = scalar_lea.sflag [#allocation3], 1
    %9 = vsyncpa %s8, 0
    %10 = vsyncpa [#allocation4], 0
    %s11 = scalar_lea.sflag [#allocation4], 1
    %12 = vsyncpa %s11, 0
    loop: start=0, step=1, limit=4
    $region2: #{tpu_custom_call.1} parent=1 // loop_pre_header
      _
    $region3: #{tpu_custom_call.1} parent=1 // loop_header
      %s14 = sphi 0, %s18
      %p15 = scmp.ge.s32.totalorder %s14, 4
      %s21 = sphi 0, %s33
      %s22 = sphi 0, %s29
      %s23 = sphi 0, %s21
      %s24 = sphi 0, %s22
      %s25 = sphi 0, %s23
      %s26 = sphi 0, %s24
      %s38 = sphi 0, %s40
      %s41 = sphi 0, %s38
      %s42 = sphi 0, %s41
      %s58 = sphi 0, %s42
      %s64 = sphi 0, %s66
      %s67 = sphi 0, %s64
      %s68 = sphi 0, %s67
      %s84 = sphi 0, %s68
      %s92 = sphi 0, %s94
      %s95 = sphi 0, %s92
      %s96 = sphi 0, %s95
      %s112 = sphi 0, %s96
    $region4: #{tpu_custom_call.1} parent=1 // loop_header_branch
      %17 = sbr.rel (%p15) target = $region8
    $region5: #{tpu_custom_call.1} parent=1 // loop_body
      %s19 = ssub.s32 %s14, 1
      %s20 = ssub.s32 %s14, 2
      %s27 = sadd.s32 1, %s22
      %p28 = scmp.ge.s32.totalorder %s27, 2
      %s29 = scalar_select %p28, 0, %s27
      %s30 = sadd.s32 1, %s21
      %s31 = scalar_select %p28, %s30, %s21
      %p32 = scmp.ge.s32.totalorder %s31, 1
      %s33 = scalar_select %p32, 0, %s31
      %s34 = ssub.s32 %s21, %s33
      %s35 = ssub.s32 %s22, %s29
      %s36 = sor.u32 %s34, %s35
      %p37 = scmp.eq.s32.totalorder %s36, 0
      %s39 = sadd.s32 %s38, 1
      %s40 = scalar_select %p37, %s38, %s39
      %p43 = pneg %p37
      %p44 = scmp.eq.s32.totalorder %s14, 1
      %p45 = por %p43, %p44
      %p46 = scmp.ne.s32.totalorder %s38, %s41
      %p47 = scmp.eq.s32.totalorder %s14, 0
      %p48 = por %p46, %p47
      %p49 = scmp.ne.s32.totalorder %s38, %s41
      %p50 = scmp.eq.s32.totalorder %s19, 1
      %p51 = por %p49, %p50
      %p52 = scmp.ne.s32.totalorder %s41, %s42
      %p53 = scmp.eq.s32.totalorder %s19, 0
      %p54 = por %p52, %p53
      %p55 = scmp.ne.s32.totalorder %s41, %s42
      %p56 = scmp.eq.s32.totalorder %s20, 1
      %p57 = por %p55, %p56
      %p59 = scmp.ne.s32.totalorder %s42, %s58
      %p60 = scmp.eq.s32.totalorder %s20, 0
      %p61 = por %p59, %p60
      %s62 = ssub.s32 %s21, %s33
      %p63 = scmp.eq.s32.totalorder %s62, 0
      %s65 = sadd.s32 %s64, 1
      %s66 = scalar_select %p63, %s64, %s65
      %p69 = pneg %p63
      %p70 = scmp.eq.s32.totalorder %s14, 1
      %p71 = por %p69, %p70
      %p72 = scmp.ne.s32.totalorder %s64, %s67
      %p73 = scmp.eq.s32.totalorder %s14, 0
      %p74 = por %p72, %p73
      %p75 = scmp.ne.s32.totalorder %s64, %s67
      %p76 = scmp.eq.s32.totalorder %s19, 1
      %p77 = por %p75, %p76
      %p78 = scmp.ne.s32.totalorder %s67, %s68
      %p79 = scmp.eq.s32.totalorder %s19, 0
      %p80 = por %p78, %p79
      %p81 = scmp.ne.s32.totalorder %s67, %s68
      %p82 = scmp.eq.s32.totalorder %s20, 1
      %p83 = por %p81, %p82
      %p85 = scmp.ne.s32.totalorder %s68, %s84
      %p86 = scmp.eq.s32.totalorder %s20, 0
      %p87 = por %p85, %p86
      %s88 = ssub.s32 %s21, %s33
      %s89 = ssub.s32 %s22, %s29
      %s90 = sor.u32 %s88, %s89
      %p91 = scmp.eq.s32.totalorder %s90, 0
      %s93 = sadd.s32 %s92, 1
      %s94 = scalar_select %p91, %s92, %s93
      %p97 = pneg %p91
      %p98 = scmp.eq.s32.totalorder %s14, 1
      %p99 = por %p97, %p98
      %p100 = scmp.ne.s32.totalorder %s92, %s95
      %p101 = scmp.eq.s32.totalorder %s14, 0
      %p102 = por %p100, %p101
      %p103 = scmp.ne.s32.totalorder %s92, %s95
      %p104 = scmp.eq.s32.totalorder %s19, 1
      %p105 = por %p103, %p104
      %p106 = scmp.ne.s32.totalorder %s95, %s96
      %p107 = scmp.eq.s32.totalorder %s19, 0
      %p108 = por %p106, %p107
      %p109 = scmp.ne.s32.totalorder %s95, %s96
      %p110 = scmp.eq.s32.totalorder %s20, 1
      %p111 = por %p109, %p110
      %p113 = scmp.ne.s32.totalorder %s96, %s112
      %p114 = scmp.eq.s32.totalorder %s20, 0
      %p115 = por %p113, %p114
      %p116 = scmp.le.s32.totalorder 1, %s14
      %p117 = scmp.lt.s32.totalorder %s14, 3
      %p118 = pnand %p116, %p117
      %p119 = pneg %p118
      // Predicated region
      $region9: #{tpu_custom_call.1} parent=5 // pred_check
        _
      $region10: #{tpu_custom_call.1} parent=5 // pred_check_branch
        %121 = sbr.rel (%p118) target = $region12
      $region11: #{tpu_custom_call.1} parent=5 // pred_region
        %s122 = ssub.s32 %s14, 1
        // Predicated region
        $region13: #{tpu_custom_call.1} parent=11 // pred_check
          %p123 = pneg %p80
        $region14: #{tpu_custom_call.1} parent=11 // pred_check_branch
          %125 = sbr.rel (%p123) target = $region16
        $region15: #{tpu_custom_call.1} parent=11 // pred_region
          %p126 = scmp.lt.s32.totalorder %s23, 0
          %s127 = scalar_select %p126, %s23, 0
          %s128 = smul.addr %s127, 2
          %s129 = scalar_lea.vmem %s1, %s128
        $region16: #{tpu_custom_call.1} parent=11 // pred_fallthru
          _
      $region12: #{tpu_custom_call.1} parent=5 // pred_fallthru
        _
      %p130 = scmp.lt.s32.totalorder %s14, 2
      // Predicated region
      $region17: #{tpu_custom_call.1} parent=5 // pred_check
        %p131 = pneg %p130
      $region18: #{tpu_custom_call.1} parent=5 // pred_check_branch
        %133 = sbr.rel (%p131) target = $region20
      $region19: #{tpu_custom_call.1} parent=5 // pred_region
        // Predicated region
        $region21: #{tpu_custom_call.1} parent=19 // pred_check
          %p134 = pneg %p48
        $region22: #{tpu_custom_call.1} parent=19 // pred_check_branch
          %136 = sbr.rel (%p134) target = $region24
        $region23: #{tpu_custom_call.1} parent=19 // pred_region
          %s137 = sand.u32 %s38, 1
          %s138 = scalar_lea.sflag [#allocation3], %s137
          %s139 = sand.u32 %s38, 1
          %s140 = smul.addr %s139, 2
          %s141 = scalar_lea.vmem [#allocation2], %s140
          %s143 = ssub.s32 32, 32
          %144 = vsyncadd %s138, %s143
          %s145 = smul.addr %s21, 2
          %s146 = sadd.s32 %s22, %s145
          %s147 = smul.addr %s146, 32
          %s148 = scalar_lea.hbm %s0, %s147
          %s150 = sshll.u32 %s141, 4
          %s151 = int_to_ptr.vmem [resolvable:$true] %s150
          %153 = dma.hbm_to_vmem [thread:$0]  %s148, 32, %s151, %s138
        $region24: #{tpu_custom_call.1} parent=19 // pred_fallthru
          _
      $region20: #{tpu_custom_call.1} parent=5 // pred_fallthru
        _
      %p154 = scmp.le.s32.totalorder 1, %s14
      %p155 = scmp.lt.s32.totalorder %s14, 3
      %p156 = pnand %p154, %p155
      %p157 = pneg %p156
      // Predicated region
      $region25: #{tpu_custom_call.1} parent=5 // pred_check
        _
      $region26: #{tpu_custom_call.1} parent=5 // pred_check_branch
        %159 = sbr.rel (%p156) target = $region28
      $region27: #{tpu_custom_call.1} parent=5 // pred_region
        %s160 = ssub.s32 %s14, 1
        %s161 = sand.u32 %s41, 1
        %s162 = scalar_lea.sflag [#allocation3], %s161
        %s163 = sand.u32 %s41, 1
        %s164 = smul.addr %s163, 2
        %s165 = scalar_lea.vmem [#allocation2], %s164
        // Predicated region
        $region29: #{tpu_custom_call.1} parent=27 // pred_check
          %p166 = pneg %p54
        $region30: #{tpu_custom_call.1} parent=27 // pred_check_branch
          %168 = sbr.rel (%p166) target = $region32
        $region31: #{tpu_custom_call.1} parent=27 // pred_region
          %169 = dma.done %s162, 32
        $region32: #{tpu_custom_call.1} parent=27 // pred_fallthru
          _
        %s170 = sand.u32 %s41, 1
        %s171 = scalar_lea.sflag [#allocation3], %s170
        %s172 = sand.u32 %s41, 1
        %s173 = smul.addr %s172, 2
        %s174 = scalar_lea.vmem [#allocation2], %s173
        %p175 = pneg %p54
        %p176 = pneg %p51
        %p177 = scmp.lt.s32.totalorder %s23, 0
        %s178 = scalar_select %p177, %s23, 0
        %s179 = smul.addr %s178, 2
        %s180 = scalar_lea.vmem %s1, %s179
        %p181 = pneg %p80
        %p182 = pneg %p77
        %p183 = pneg %p108
        %p184 = pneg %p105
        %s185 = sand.u32 %s95, 1
        %s186 = scalar_lea.sflag [#allocation4], %s185
        %s187 = sand.u32 %s95, 1
        %s188 = smul.addr %s187, 2
        %s189 = scalar_lea.vmem [#allocation5], %s188
        %p190 = scmp.lt.s32.totalorder %s23, 0
        %s191 = scalar_select %p190, %s23, 0
        %s192 = smul.addr %s191, 2
        %s193 = scalar_lea.vmem %s1, %s192
        %v194 = vld [vmem:[%s165] sm:$0x3]
        %v195 = vld [vmem:[%s193] sm:$0x3]
        %197 = vset.pattern.permute.xlu0 0
        %198 = vperm.xlu0 %197, %v195
        %v199 = vpop.permute.xlu0 %198
        %v201 = vmul.f32 %v194, %v199
        %202 = vst [vmem:[%s189] sm:$0x3] %v201
        %s203 = sand.u32 %s95, 1
        %s204 = scalar_lea.sflag [#allocation4], %s203
        %s205 = sand.u32 %s95, 1
        %s206 = smul.addr %s205, 2
        %s207 = scalar_lea.vmem [#allocation5], %s206
        // Predicated region
        $region33: #{tpu_custom_call.1} parent=27 // pred_check
          %p208 = pneg %p105
        $region34: #{tpu_custom_call.1} parent=27 // pred_check_branch
          %210 = sbr.rel (%p208) target = $region36
        $region35: #{tpu_custom_call.1} parent=27 // pred_region
          %s212 = ssub.s32 32, 32
          %213 = vsyncadd %s204, %s212
          %s214 = smul.addr %s23, 2
          %s215 = sadd.s32 %s24, %s214
          %s216 = smul.addr %s215, 32
          %s217 = scalar_lea.hbm %s2, %s216
          %s219 = sshll.u32 %s207, 4
          %s220 = int_to_ptr.vmem [resolvable:$true] %s219
          %222 = dma.vmem_to_hbm [thread:$0]  %s220, 32, %s217, %s204
        $region36: #{tpu_custom_call.1} parent=27 // pred_fallthru
          _
      $region28: #{tpu_custom_call.1} parent=5 // pred_fallthru
        _
      %p223 = scmp.le.s32.totalorder 2, %s14
      // Predicated region
      $region37: #{tpu_custom_call.1} parent=5 // pred_check
        %p224 = pneg %p223
      $region38: #{tpu_custom_call.1} parent=5 // pred_check_branch
        %226 = sbr.rel (%p224) target = $region40
      $region39: #{tpu_custom_call.1} parent=5 // pred_region
        %s227 = ssub.s32 %s14, 2
        // Predicated region
        $region41: #{tpu_custom_call.1} parent=39 // pred_check
          %p228 = pneg %p111
        $region42: #{tpu_custom_call.1} parent=39 // pred_check_branch
          %230 = sbr.rel (%p228) target = $region44
        $region43: #{tpu_custom_call.1} parent=39 // pred_region
          %s231 = sand.u32 %s96, 1
          %s232 = scalar_lea.sflag [#allocation4], %s231
          %s233 = sand.u32 %s96, 1
          %s234 = smul.addr %s233, 2
          %s235 = scalar_lea.vmem [#allocation5], %s234
          %236 = dma.done %s232, 32
        $region44: #{tpu_custom_call.1} parent=39 // pred_fallthru
          _
      $region40: #{tpu_custom_call.1} parent=5 // pred_fallthru
        _
    $region6: #{tpu_custom_call.1} parent=1 // loop_footer
      %s18 = sadd.s32 1, %s14
    $region7: #{tpu_custom_call.1} parent=1 // loop_footer_branch
      %13 = sbr.rel target = $region3
    $region8: #{tpu_custom_call.1} parent=1 // loop_exit
      _
    %237 = vsyncpa [#allocation3], 1
    %s238 = scalar_lea.sflag [#allocation3], 1
    %239 = vsyncpa %s238, 1
    %240 = vsyncpa [#allocation4], 1
    %s241 = scalar_lea.sflag [#allocation4], 1
    %242 = vsyncpa %s241, 1

</llo_original>
